<compile_context>
chip_gen: v7x
topology: tpu7x:2x2x1
jax: 0.10.0
libtpu: 0.0.40
codegen_flags: <defaults>
</compile_context>

<pallas_src>
import jax
import jax.numpy as jnp
from jax.experimental import pallas as pl
from jax.experimental.pallas import tpu as pltpu

LANE = 128


def _fmn_kernel(x_ref, w1_ref, b1_ref, wm_ref, hb_ref, out_ref):
    # x:   (1, TB)   batch along the lane axis              (compute dtype)
    # w1:  (EH, 1)   0.5 * full[0].weight                   (compute dtype)
    # b1:  (EH, 1)   0.5 * full[0].bias                     (compute dtype)
    # wm:  (E, EH)   0.25 * (hidden_weights * mask)         (compute dtype)
    # hb:  (E, 1)    0.25 * rowsum(wm) + 0.5 * hidden_bias  (f32)
    # out: (E, TB)   transposed output (wrapper transposes back)
    #
    # Sigmoid affine constants are pre-folded into the weights by the wrapper,
    # so the only work on the big (EH, TB) intermediate is one VPU fma and one
    # EUP tanh per element (in bf16 on the bf16 path - no extra cast pass).
    t = jnp.tanh(w1_ref[...] * x_ref[...] + b1_ref[...])                 # (EH, TB)
    pre2 = jnp.dot(wm_ref[...], t, preferred_element_type=jnp.float32)   # (E, TB) f32
    out_ref[...] = (0.5 * (jnp.tanh(pre2 + hb_ref[...]) + 1.0)).astype(out_ref.dtype)


def _vmem_limit_bytes():
    """Scoped-VMEM limit, with headroom on 64 MiB parts (v7x)."""
    cap = 128 << 20
    try:
        cap = int(getattr(pltpu.get_tpu_info(), "vmem_capacity_bytes", cap))
    except Exception:
        pass
    return (44 << 20) if cap <= (64 << 20) else (64 << 20)


def _choose_tile(b_pad, eh, e, compute_bytes, out_bytes, max_tile, vmem_budget_bytes):
    """Largest lane-aligned batch tile whose per-step working set fits the budget."""
    e_rows = max(e, 8)
    per_col = (2 * eh * compute_bytes      # z and tanh(z) (EH, TB) intermediates
               + e_rows * 4                # f32 MXU result tile (E, TB)
               + 2 * e_rows * out_bytes    # double-buffered out block
               + 2 * 8 * compute_bytes)    # double-buffered x block (>=8 sublanes)
    tb = (vmem_budget_bytes // per_col) // LANE * LANE
    tb = max(LANE, min(tb, max_tile, b_pad))
    # Keep >=2 grid steps when the batch allows it: shards across the 2 TCs on
    # v7x via dimension_semantics=("parallel",), and overlaps compute/writeback
    # on single-TC chips.
    if b_pad >= 2 * LANE:
        tb = max(LANE, min(tb, (b_pad // 2) // LANE * LANE))
    return tb


def fmn_forward(x, w1, b1, hidden_weights, mask, hidden_bias,
                *, matmul_dtype=jnp.float32, out_dtype=jnp.float32, max_tile=4096):
    """Pallas forward for fmnSystem.

    x:              (B, 1)  f32
    w1:             (EH, 1) f32  -- full[0].weight
    b1:             (EH,)   f32  -- full[0].bias
    hidden_weights: (E, EH) f32  -- torch layout
    mask:           (E, EH) f32
    hidden_bias:    (E,)    f32 or None
    matmul_dtype:   compute dtype for the hidden chain (bf16 recommended on v6e/v7x)
    out_dtype:      kernel output dtype (bf16 halves writeback bytes; sigmoid
                    outputs in [0,1] lose nothing meaningful)
    returns:        (B, E)  out_dtype
    """
    B = x.shape[0]
    EH = w1.shape[0]
    E = hidden_weights.shape[0]

    compute_dtype = jnp.dtype(matmul_dtype)
    compute_bytes = compute_dtype.itemsize
    out_bytes = jnp.dtype(out_dtype).itemsize

    # ---- Fold the sigmoid affine constants into the weights (see header). ----
    wm_f32 = (hidden_weights * mask).astype(jnp.float32)                   # (E, EH)
    hb_f32 = (jnp.zeros((E,), jnp.float32) if hidden_bias is None
              else hidden_bias.astype(jnp.float32))
    x_t = x.reshape(B, 1).T.astype(compute_dtype)                          # (1, B)
    w1_c = (0.5 * w1.reshape(EH, 1).astype(jnp.float32)).astype(compute_dtype)
    b1_c = (0.5 * b1.reshape(EH, 1).astype(jnp.float32)).astype(compute_dtype)
    wm2 = (0.25 * wm_f32).astype(compute_dtype)                            # (E, EH)
    hb2 = (0.25 * jnp.sum(wm_f32, axis=1) + 0.5 * hb_f32).reshape(E, 1)    # (E, 1) f32

    # ---- Tile selection: budget consistent with the compiler VMEM limit. ----
    vmem_limit = _vmem_limit_bytes()
    resident_bytes = E * EH * compute_bytes + 2 * EH * compute_bytes + E * 4
    budget = max(4 << 20, vmem_limit - 2 * resident_bytes - (8 << 20))
    b_pad = pl.cdiv(B, LANE) * LANE
    tb = _choose_tile(b_pad, EH, E, compute_bytes, out_bytes, max_tile, budget)
    b_pad = pl.cdiv(b_pad, tb) * tb
    if b_pad != B:
        x_t = jnp.pad(x_t, ((0, 0), (0, b_pad - B)))

    grid = (b_pad // tb,)

    cost = pl.CostEstimate(
        flops=2 * b_pad * EH * E + 2 * b_pad * EH,
        transcendentals=b_pad * (EH + E),
        bytes_accessed=(compute_bytes * (b_pad + 2 * EH + E * EH)
                        + 4 * E + out_bytes * b_pad * E),
    )

    def build(single_buffer_weights):
        resident_kw = ({"pipeline_mode": pl.Buffered(1)}
                       if single_buffer_weights else {})
        return pl.pallas_call(
            _fmn_kernel,
            out_shape=jax.ShapeDtypeStruct((E, b_pad), out_dtype),
            grid=grid,
            in_specs=[
                pl.BlockSpec((1, tb), lambda i: (0, i)),                 # x tile (lane-dense)
                pl.BlockSpec((EH, 1), lambda i: (0, 0), **resident_kw),  # weights stay VMEM-
                pl.BlockSpec((EH, 1), lambda i: (0, 0), **resident_kw),  # resident: constant
                pl.BlockSpec((E, EH), lambda i: (0, 0), **resident_kw),  # block index, single
                pl.BlockSpec((E, 1), lambda i: (0, 0), **resident_kw),   # buffer.
            ],
            out_specs=pl.BlockSpec((E, tb), lambda i: (0, i)),
            compiler_params=pltpu.CompilerParams(
                dimension_semantics=("parallel",),   # shards batch across TCs (v7x)
                vmem_limit_bytes=vmem_limit,
            ),
            cost_estimate=cost,
        )

    args = (x_t, w1_c, b1_c, wm2, hb2)
    try:
        out_t = build(True)(*args)
    except Exception:
        # Fallback for jax versions without single-buffer pipeline_mode support:
        # identical kernel with default double-buffered (still resident) weights.
        out_t = build(False)(*args)

    return out_t[:, :B].T                                                  # (B, E)


# ---------------------------------------------------------------------------
# Parameter construction + pure-JAX reference (mirrors the PyTorch module).
# ---------------------------------------------------------------------------

def diag_mask(rows, elements, hidden_size):
    """(E*H, E): mask[j, i] = 1 iff hidden unit j belongs to subnet i."""
    j = jnp.arange(rows)[:, None]
    i = jnp.arange(elements)[None, :]
    return ((j // hidden_size) == i).astype(jnp.float32)


def make_params(key, elements, hidden_size, bias=True):
    eh = elements * hidden_size
    k1, k2, k3 = jax.random.split(key, 3)
    # full[0]: Linear(1, E*H); weight init normal(0,1); torch default bias init
    # with fan_in=1 is U(-1, 1).  bias=False => no first-layer bias, no hidden bias.
    w1 = jax.random.normal(k1, (eh, 1), dtype=jnp.float32)
    b1 = (jax.random.uniform(k2, (eh,), jnp.float32, -1.0, 1.0)
          if bias else jnp.zeros((eh,), jnp.float32))
    m = diag_mask(eh, elements, hidden_size)                         # (EH, E)
    hw = (jax.random.normal(k3, (eh, elements), jnp.float32) / hidden_size) * m
    hidden_weights = hw.T                                            # (E, EH) torch layout
    mask = m.T                                                       # (E, EH)
    hidden_bias = jnp.zeros((elements,), jnp.float32) if bias else None
    return w1, b1, hidden_weights, mask, hidden_bias


def fmn_forward_ref(x, w1, b1, hidden_weights, mask, hidden_bias):
    """Pure-JAX reference mirroring fmnSystem.forward."""
    h = jax.nn.sigmoid(x @ w1.T + b1[None, :])
    pre = h @ (hidden_weights * mask).T
    if hidden_bias is not None:
        pre = pre + hidden_bias[None, :]
    return jax.nn.sigmoid(pre)


if __name__ == "__main__":
    elements = 4
    hidden_size = 32
    batch = 8

    key = jax.random.PRNGKey(0)
    kp, kx = jax.random.split(key)
    w1, b1, hw, mask, hb = make_params(kp, elements, hidden_size, bias=True)
    x = jax.random.normal(kx, (batch, 1), dtype=jnp.float32)

    ref = fmn_forward_ref(x, w1, b1, hw, mask, hb)

    # f32 path (exact torch semantics on all TPU generations, incl. v5e).
    out = jax.block_until_ready(fmn_forward(x, w1, b1, hw, mask, hb))
    assert out.shape == (batch, elements)
    assert jnp.allclose(out, ref, atol=1e-4, rtol=1e-4), "f32 kernel mismatch"

    # bf16 hidden chain + bf16 output (recommended on v6e/v7x: ~2x on the EUP
    # bottleneck, no extra cast pass, half the HBM writeback bytes).
    out_bf16 = jax.block_until_ready(
        fmn_forward(x, w1, b1, hw, mask, hb,
                    matmul_dtype=jnp.bfloat16, out_dtype=jnp.bfloat16))
    assert out_bf16.shape == (batch, elements)
    assert jnp.allclose(out_bf16.astype(jnp.float32), ref, atol=2e-2, rtol=0), \
        "bf16 kernel mismatch"

    print("KERNEL_OK")
</pallas_src>

<mosaic_0001>
module attributes {stable_mosaic.version = 11 : i64} {
  func.func @_fmn_kernel(%arg0: i32, %arg1: memref<1x128xf32, #tpu.memory_space<vmem>>, %arg2: memref<128x1xf32, #tpu.memory_space<vmem>>, %arg3: memref<128x1xf32, #tpu.memory_space<vmem>>, %arg4: memref<4x128xf32, #tpu.memory_space<vmem>>, %arg5: memref<4x1xf32, #tpu.memory_space<vmem>>, %arg6: memref<4x128xf32, #tpu.memory_space<vmem>>) attributes {dimension_semantics = [#tpu.dimension_semantics<parallel>], iteration_bounds = array<i64: 1>, scalar_prefetch = 0 : i64, scratch_operands = 0 : i64, tpu.core_type = #tpu.core_type<tc>, window_params = [{transform_indices = @transform_0, window_bounds = array<i64: 1, 128>}, {pipeline_mode = #tpu.pipeline_mode<synchronous>, transform_indices = @transform_1, window_bounds = array<i64: 128, 1>}, {pipeline_mode = #tpu.pipeline_mode<synchronous>, transform_indices = @transform_2, window_bounds = array<i64: 128, 1>}, {pipeline_mode = #tpu.pipeline_mode<synchronous>, transform_indices = @transform_3, window_bounds = array<i64: 4, 128>}, {pipeline_mode = #tpu.pipeline_mode<synchronous>, transform_indices = @transform_4, window_bounds = array<i64: 4, 1>}, {transform_indices = @transform_5, window_bounds = array<i64: 4, 128>}]} {
    %c0 = arith.constant 0 : index
    %c0_0 = arith.constant 0 : index
    %0 = vector.load %arg2[%c0, %c0_0] : memref<128x1xf32, #tpu.memory_space<vmem>>, vector<128x1xf32>
    %c0_1 = arith.constant 0 : index
    %c0_2 = arith.constant 0 : index
    %1 = vector.load %arg1[%c0_1, %c0_2] : memref<1x128xf32, #tpu.memory_space<vmem>>, vector<1x128xf32>
    %2 = vector.broadcast %0 : vector<128x1xf32> to vector<128x128xf32>
    %3 = vector.broadcast %1 : vector<1x128xf32> to vector<128x128xf32>
    %4 = arith.mulf %2, %3 : vector<128x128xf32>
    %c0_3 = arith.constant 0 : index
    %c0_4 = arith.constant 0 : index
    %5 = vector.load %arg3[%c0_3, %c0_4] : memref<128x1xf32, #tpu.memory_space<vmem>>, vector<128x1xf32>
    %6 = vector.broadcast %5 : vector<128x1xf32> to vector<128x128xf32>
    %7 = arith.addf %4, %6 : vector<128x128xf32>
    %8 = math.tanh %7 : vector<128x128xf32>
    %c0_5 = arith.constant 0 : index
    %c0_6 = arith.constant 0 : index
    %9 = vector.load %arg4[%c0_5, %c0_6] : memref<4x128xf32, #tpu.memory_space<vmem>>, vector<4x128xf32>
    %cst = arith.constant dense<0.000000e+00> : vector<4x128xf32>
    %10 = tpu.matmul %9, %8, %cst {dimension_numbers = #tpu.dot_dimension_numbers<[1], [0], [0], [1], [0, 0, 1, 1], [], []>} : vector<4x128xf32>, vector<128x128xf32>, vector<4x128xf32> -> vector<4x128xf32>
    %c0_7 = arith.constant 0 : index
    %c0_8 = arith.constant 0 : index
    %11 = vector.load %arg5[%c0_7, %c0_8] : memref<4x1xf32, #tpu.memory_space<vmem>>, vector<4x1xf32>
    %12 = vector.broadcast %11 : vector<4x1xf32> to vector<4x128xf32>
    %13 = arith.addf %10, %12 : vector<4x128xf32>
    %14 = math.tanh %13 : vector<4x128xf32>
    %cst_9 = arith.constant 1.000000e+00 : f32
    %15 = vector.broadcast %cst_9 : f32 to vector<4x128xf32>
    %16 = arith.addf %14, %15 : vector<4x128xf32>
    %cst_10 = arith.constant 5.000000e-01 : f32
    %17 = vector.broadcast %cst_10 : f32 to vector<4x128xf32>
    %18 = arith.mulf %17, %16 : vector<4x128xf32>
    %c0_11 = arith.constant 0 : index
    %c0_12 = arith.constant 0 : index
    %19 = vector.load %arg6[%c0_11, %c0_12] : memref<4x128xf32, #tpu.memory_space<vmem>>, vector<4x128xf32>
    tpu.vector_store %arg6[%c0_11, %c0_12], %18 {strides = array<i32>} : memref<4x128xf32, #tpu.memory_space<vmem>>, vector<4x128xf32>,
    return
  }
  func.func @transform_0(%arg0: i32) -> (i32, i32) {
    %c0_i32 = arith.constant 0 : i32
    %c0_i32_0 = arith.constant 0 : i32
    return %c0_i32, %arg0 : i32, i32
  }
  func.func @transform_1(%arg0: i32) -> (i32, i32) {
    %c0_i32 = arith.constant 0 : i32
    %c0_i32_0 = arith.constant 0 : i32
    %c0_i32_1 = arith.constant 0 : i32
    return %c0_i32, %c0_i32_0 : i32, i32
  }
  func.func @transform_2(%arg0: i32) -> (i32, i32) {
    %c0_i32 = arith.constant 0 : i32
    %c0_i32_0 = arith.constant 0 : i32
    %c0_i32_1 = arith.constant 0 : i32
    return %c0_i32, %c0_i32_0 : i32, i32
  }
  func.func @transform_3(%arg0: i32) -> (i32, i32) {
    %c0_i32 = arith.constant 0 : i32
    %c0_i32_0 = arith.constant 0 : i32
    %c0_i32_1 = arith.constant 0 : i32
    return %c0_i32, %c0_i32_0 : i32, i32
  }
  func.func @transform_4(%arg0: i32) -> (i32, i32) {
    %c0_i32 = arith.constant 0 : i32
    %c0_i32_0 = arith.constant 0 : i32
    %c0_i32_1 = arith.constant 0 : i32
    return %c0_i32, %c0_i32_0 : i32, i32
  }
  func.func @transform_5(%arg0: i32) -> (i32, i32) {
    %c0_i32 = arith.constant 0 : i32
    %c0_i32_0 = arith.constant 0 : i32
    return %c0_i32, %arg0 : i32, i32
  }
}

module attributes {stable_mosaic.version = 11 : i64} {
  func.func @_fmn_kernel(%arg0: i32, %arg1: memref<1x128xf32, #tpu.memory_space<vmem>>, %arg2: memref<128x1xf32, #tpu.memory_space<vmem>>, %arg3: memref<128x1xf32, #tpu.memory_space<vmem>>, %arg4: memref<4x128xf32, #tpu.memory_space<vmem>>, %arg5: memref<4x1xf32, #tpu.memory_space<vmem>>, %arg6: memref<4x128xf32, #tpu.memory_space<vmem>>) attributes {dimension_semantics = [#tpu.dimension_semantics<parallel>], iteration_bounds = array<i64: 1>, scalar_prefetch = 0 : i64, scratch_operands = 0 : i64, tpu.core_type = #tpu.core_type<tc>, window_params = [{transform_indices = @transform_0, window_bounds = array<i64: 1, 128>}, {pipeline_mode = #tpu.pipeline_mode<synchronous>, transform_indices = @transform_1, window_bounds = array<i64: 128, 1>}, {pipeline_mode = #tpu.pipeline_mode<synchronous>, transform_indices = @transform_2, window_bounds = array<i64: 128, 1>}, {pipeline_mode = #tpu.pipeline_mode<synchronous>, transform_indices = @transform_3, window_bounds = array<i64: 4, 128>}, {pipeline_mode = #tpu.pipeline_mode<synchronous>, transform_indices = @transform_4, window_bounds = array<i64: 4, 1>}, {transform_indices = @transform_5, window_bounds = array<i64: 4, 128>}]} {
    %c0 = arith.constant 0 : index
    %c0_0 = arith.constant 0 : index
    %0 = vector.load %arg2[%c0, %c0_0] : memref<128x1xf32, #tpu.memory_space<vmem>>, vector<128x1xf32>
    %c0_1 = arith.constant 0 : index
    %c0_2 = arith.constant 0 : index
    %1 = vector.load %arg1[%c0_1, %c0_2] : memref<1x128xf32, #tpu.memory_space<vmem>>, vector<1x128xf32>
    %2 = vector.broadcast %0 : vector<128x1xf32> to vector<128x128xf32>
    %3 = vector.broadcast %1 : vector<1x128xf32> to vector<128x128xf32>
    %4 = arith.mulf %2, %3 : vector<128x128xf32>
    %c0_3 = arith.constant 0 : index
    %c0_4 = arith.constant 0 : index
    %5 = vector.load %arg3[%c0_3, %c0_4] : memref<128x1xf32, #tpu.memory_space<vmem>>, vector<128x1xf32>
    %6 = vector.broadcast %5 : vector<128x1xf32> to vector<128x128xf32>
    %7 = arith.addf %4, %6 : vector<128x128xf32>
    %8 = math.tanh %7 : vector<128x128xf32>
    %c0_5 = arith.constant 0 : index
    %c0_6 = arith.constant 0 : index
    %9 = vector.load %arg4[%c0_5, %c0_6] : memref<4x128xf32, #tpu.memory_space<vmem>>, vector<4x128xf32>
    %cst = arith.constant dense<0.000000e+00> : vector<4x128xf32>
    %10 = tpu.matmul %9, %8, %cst {dimension_numbers = #tpu.dot_dimension_numbers<[1], [0], [0], [1], [0, 0, 1, 1], [], []>} : vector<4x128xf32>, vector<128x128xf32>, vector<4x128xf32> -> vector<4x128xf32>
    %c0_7 = arith.constant 0 : index
    %c0_8 = arith.constant 0 : index
    %11 = vector.load %arg5[%c0_7, %c0_8] : memref<4x1xf32, #tpu.memory_space<vmem>>, vector<4x1xf32>
    %12 = vector.broadcast %11 : vector<4x1xf32> to vector<4x128xf32>
    %13 = arith.addf %10, %12 : vector<4x128xf32>
    %14 = math.tanh %13 : vector<4x128xf32>
    %cst_9 = arith.constant 1.000000e+00 : f32
    %15 = vector.broadcast %cst_9 : f32 to vector<4x128xf32>
    %16 = arith.addf %14, %15 : vector<4x128xf32>
    %cst_10 = arith.constant 5.000000e-01 : f32
    %17 = vector.broadcast %cst_10 : f32 to vector<4x128xf32>
    %18 = arith.mulf %17, %16 : vector<4x128xf32>
    %c0_11 = arith.constant 0 : index
    %c0_12 = arith.constant 0 : index
    %19 = vector.load %arg6[%c0_11, %c0_12] : memref<4x128xf32, #tpu.memory_space<vmem>>, vector<4x128xf32>
    tpu.vector_store %arg6[%c0_11, %c0_12], %18 {strides = array<i32>} : memref<4x128xf32, #tpu.memory_space<vmem>>, vector<4x128xf32>,
    return
  }
  func.func @transform_0(%arg0: i32) -> (i32, i32) {
    %c0_i32 = arith.constant 0 : i32
    %c0_i32_0 = arith.constant 0 : i32
    return %c0_i32, %arg0 : i32, i32
  }
  func.func @transform_1(%arg0: i32) -> (i32, i32) {
    %c0_i32 = arith.constant 0 : i32
    %c0_i32_0 = arith.constant 0 : i32
    %c0_i32_1 = arith.constant 0 : i32
    return %c0_i32, %c0_i32_0 : i32, i32
  }
  func.func @transform_2(%arg0: i32) -> (i32, i32) {
    %c0_i32 = arith.constant 0 : i32
    %c0_i32_0 = arith.constant 0 : i32
    %c0_i32_1 = arith.constant 0 : i32
    return %c0_i32, %c0_i32_0 : i32, i32
  }
  func.func @transform_3(%arg0: i32) -> (i32, i32) {
    %c0_i32 = arith.constant 0 : i32
    %c0_i32_0 = arith.constant 0 : i32
    %c0_i32_1 = arith.constant 0 : i32
    return %c0_i32, %c0_i32_0 : i32, i32
  }
  func.func @transform_4(%arg0: i32) -> (i32, i32) {
    %c0_i32 = arith.constant 0 : i32
    %c0_i32_0 = arith.constant 0 : i32
    %c0_i32_1 = arith.constant 0 : i32
    return %c0_i32, %c0_i32_0 : i32, i32
  }
  func.func @transform_5(%arg0: i32) -> (i32, i32) {
    %c0_i32 = arith.constant 0 : i32
    %c0_i32_0 = arith.constant 0 : i32
    return %c0_i32, %arg0 : i32, i32
  }
}

</mosaic_0001>

<llo_original>
// kernel: tpu_custom_call.1
$region0: #{tpu_custom_call.1}
  #allocation0 [shape = 'u32[]', space=smem, size = 0x4, offset = 0x4, fixed_abs, tag = 'smem constant byte address 0x4 - core index']
  #allocation1 [shape = 'u32[144,128]{1,0:T(1,128)}', space=vmem, size = 0x12000, scoped, tag = 'internal scratch']
  %s0 = inlined_call_operand.hbm [shape: f32[1,128], index: 0, kind: input, shape index: {}]
  %s1 = inlined_call_operand.hbm [shape: f32[128,1], index: 1, kind: input, shape index: {}]
  %s2 = inlined_call_operand.hbm [shape: f32[128,1], index: 2, kind: input, shape index: {}]
  %s3 = inlined_call_operand.hbm [shape: f32[4,128], index: 3, kind: input, shape index: {}]
  %s4 = inlined_call_operand.hbm [shape: f32[4,1], index: 4, kind: input, shape index: {}]
  %s5 = inlined_call_operand.hbm [shape: f32[4,128], index: 5, kind: output, shape index: {}]
  %s6 = sld [smem:[#allocation0]]
  $region50: #{tpu_custom_call.1} parent=0
    _
  %s8 = ssub.s32 1, %s6
  %s9 = scalar_select 0, %s8, %s6
  $region1: #{tpu_custom_call.1} parent=0
    #allocation2 [shape = 'u8[512]{0}', space=vmem, size = 0x400, scoped, tag = 'input window, operand 0, single buffered']
    #allocation3 [shape = 's32[1]{0}', space=sflag, size = 0x4, scoped, tag = 'scoped memory for tpu_custom_call.1']
    #allocation4 [shape = 's32[1]{0}', space=sflag, size = 0x4, scoped, tag = 'scoped memory for tpu_custom_call.1']
    #allocation5 [shape = 'u8[65536]{0}', space=vmem, size = 0x10000, scoped, tag = 'input window, operand 1, single buffered']
    #allocation6 [shape = 's32[1]{0}', space=sflag, size = 0x4, scoped, tag = 'scoped memory for tpu_custom_call.1']
    #allocation7 [shape = 'u8[65536]{0}', space=vmem, size = 0x10000, scoped, tag = 'input window, operand 2, single buffered']
    #allocation8 [shape = 'u8[2048]{0}', space=vmem, size = 0x800, scoped, tag = 'input window, operand 3, single buffered']
    #allocation9 [shape = 's32[1]{0}', space=sflag, size = 0x4, scoped, tag = 'scoped memory for tpu_custom_call.1']
    #allocation10 [shape = 'u8[2048]{0}', space=vmem, size = 0x800, scoped, tag = 'input window, operand 4, single buffered']
    #allocation11 [shape = 'u8[2048]{0}', space=vmem, size = 0x800, scoped, tag = 'output window, operand 0, single buffered']
    %10 = vsyncpa [#allocation3], 0
    %11 = vsyncpa [#allocation6], 0
    %12 = vsyncpa [#allocation9], 0
    %13 = vsyncpa [#allocation4], 0
    // Predicated region
    $region2: #{tpu_custom_call.1} parent=1 // pred_check
      _
    $region3: #{tpu_custom_call.1} parent=1 // pred_check_branch
      %15 = sbr.rel (0) target = $region5
    $region4: #{tpu_custom_call.1} parent=1 // pred_region
      %s17 = ssub.s32 16, 16
      %18 = vsyncadd [#allocation3], %s17
      %s20 = sshll.u32 [#allocation2], 4
      %s21 = int_to_ptr.vmem [resolvable:$true] %s20
      %23 = dma.hbm_to_vmem [thread:$0]  %s0, 16, %s21, [#allocation3]
    $region5: #{tpu_custom_call.1} parent=1 // pred_fallthru
      _
    // Predicated region
    $region6: #{tpu_custom_call.1} parent=1 // pred_check
      _
    $region7: #{tpu_custom_call.1} parent=1 // pred_check_branch
      %25 = sbr.rel (0) target = $region9
    $region8: #{tpu_custom_call.1} parent=1 // pred_region
      %s27 = ssub.s32 2048, 2048
      %28 = vsyncadd [#allocation6], %s27
      %s29 = sshll.u32 [#allocation5], 4
      %s30 = int_to_ptr.vmem [resolvable:$true] %s29
      %35 = dma.hbm_to_vmem [thread:$0]  %s1, 2048, %s30, [#allocation6], 128, 128, 8
    $region9: #{tpu_custom_call.1} parent=1 // pred_fallthru
      _
    // Predicated region
    $region10: #{tpu_custom_call.1} parent=1 // pred_check
      _
    $region11: #{tpu_custom_call.1} parent=1 // pred_check_branch
      %37 = sbr.rel (0) target = $region13
    $region12: #{tpu_custom_call.1} parent=1 // pred_region
      %s39 = ssub.s32 2048, 2048
      %40 = vsyncadd [#allocation6], %s39
      %s41 = sshll.u32 [#allocation7], 4
      %s42 = int_to_ptr.vmem [resolvable:$true] %s41
      %47 = dma.hbm_to_vmem [thread:$0]  %s2, 2048, %s42, [#allocation6], 128, 128, 8
    $region13: #{tpu_custom_call.1} parent=1 // pred_fallthru
      _
    // Predicated region
    $region14: #{tpu_custom_call.1} parent=1 // pred_check
      _
    $region15: #{tpu_custom_call.1} parent=1 // pred_check_branch
      %49 = sbr.rel (0) target = $region17
    $region16: #{tpu_custom_call.1} parent=1 // pred_region
      %s51 = ssub.s32 64, 64
      %52 = vsyncadd [#allocation9], %s51
      %s54 = sshll.u32 [#allocation8], 4
      %s55 = int_to_ptr.vmem [resolvable:$true] %s54
      %57 = dma.hbm_to_vmem [thread:$0]  %s3, 64, %s55, [#allocation9]
    $region17: #{tpu_custom_call.1} parent=1 // pred_fallthru
      _
    // Predicated region
    $region18: #{tpu_custom_call.1} parent=1 // pred_check
      _
    $region19: #{tpu_custom_call.1} parent=1 // pred_check_branch
      %59 = sbr.rel (0) target = $region21
    $region20: #{tpu_custom_call.1} parent=1 // pred_region
      %s61 = ssub.s32 64, 64
      %62 = vsyncadd [#allocation9], %s61
      %s64 = sshll.u32 [#allocation10], 4
      %s65 = int_to_ptr.vmem [resolvable:$true] %s64
      %67 = dma.hbm_to_vmem [thread:$0]  %s4, 64, %s65, [#allocation9]
    $region21: #{tpu_custom_call.1} parent=1 // pred_fallthru
      _
    // Predicated region
    $region22: #{tpu_custom_call.1} parent=1 // pred_check
      _
    $region23: #{tpu_custom_call.1} parent=1 // pred_check_branch
      %69 = sbr.rel (0) target = $region25
    $region24: #{tpu_custom_call.1} parent=1 // pred_region
      %70 = dma.done [#allocation3], 16
    $region25: #{tpu_custom_call.1} parent=1 // pred_fallthru
      _
    // Predicated region
    $region26: #{tpu_custom_call.1} parent=1 // pred_check
      _
    $region27: #{tpu_custom_call.1} parent=1 // pred_check_branch
      %72 = sbr.rel (0) target = $region29
    $region28: #{tpu_custom_call.1} parent=1 // pred_region
      %73 = dma.done [#allocation6], 2048
    $region29: #{tpu_custom_call.1} parent=1 // pred_fallthru
      _
    // Predicated region
    $region30: #{tpu_custom_call.1} parent=1 // pred_check
      _
    $region31: #{tpu_custom_call.1} parent=1 // pred_check_branch
      %75 = sbr.rel (0) target = $region33
    $region32: #{tpu_custom_call.1} parent=1 // pred_region
      %76 = dma.done [#allocation6], 2048
    $region33: #{tpu_custom_call.1} parent=1 // pred_fallthru
      _
    // Predicated region
    $region34: #{tpu_custom_call.1} parent=1 // pred_check
      _
    $region35: #{tpu_custom_call.1} parent=1 // pred_check_branch
      %78 = sbr.rel (0) target = $region37
    $region36: #{tpu_custom_call.1} parent=1 // pred_region
      %79 = dma.done [#allocation9], 64
    $region37: #{tpu_custom_call.1} parent=1 // pred_fallthru
      _
    // Predicated region
    $region38: #{tpu_custom_call.1} parent=1 // pred_check
      _
    $region39: #{tpu_custom_call.1} parent=1 // pred_check_branch
      %81 = sbr.rel (0) target = $region41
    $region40: #{tpu_custom_call.1} parent=1 // pred_region
      %82 = dma.done [#allocation9], 64
    $region41: #{tpu_custom_call.1} parent=1 // pred_fallthru
      _
    %v83 = vld [vmem:[#allocation5] sm:$0xff]
    %v84 = vld [vmem:[#allocation5 + $0x8] sm:$0xff]
    %v85 = vld [vmem:[#allocation5 + $0x10] sm:$0xff]
    %v86 = vld [vmem:[#allocation5 + $0x18] sm:$0xff]
    %v87 = vld [vmem:[#allocation5 + $0x20] sm:$0xff]
    %v88 = vld [vmem:[#allocation5 + $0x28] sm:$0xff]
    %v89 = vld [vmem:[#allocation5 + $0x30] sm:$0xff]
    %v90 = vld [vmem:[#allocation5 + $0x38] sm:$0xff]
    %v91 = vld [vmem:[#allocation5 + $0x40] sm:$0xff]
    %v92 = vld [vmem:[#allocation5 + $0x48] sm:$0xff]
    %v93 = vld [vmem:[#allocation5 + $0x50] sm:$0xff]
    %v94 = vld [vmem:[#allocation5 + $0x58] sm:$0xff]
    %v95 = vld [vmem:[#allocation5 + $0x60] sm:$0xff]
    %v96 = vld [vmem:[#allocation5 + $0x68] sm:$0xff]
    %v97 = vld [vmem:[#allocation5 + $0x70] sm:$0xff]
    %v98 = vld [vmem:[#allocation5 + $0x78] sm:$0xff]
    %v99 = vld [vmem:[#allocation2] sm:$0x1]
    %101 = vset.pattern.permute.xlu0 0
    %102 = vperm.xlu0 %101, %v83
    %v103 = vpop.permute.xlu0 %102
    %106 = vset.pattern.permute.xlu0 0
    %107 = vperm.xlu0 %106, %v84
    %v108 = vpop.permute.xlu0 %107
    %111 = vset.pattern.permute.xlu0 0
    %112 = vperm.xlu0 %111, %v85
    %v113 = vpop.permute.xlu0 %112
    %116 = vset.pattern.permute.xlu0 0
    %117 = vperm.xlu0 %116, %v86
    %v118 = vpop.permute.xlu0 %117
    %121 = vset.pattern.permute.xlu0 0
    %122 = vperm.xlu0 %121, %v87
    %v123 = vpop.permute.xlu0 %122
    %126 = vset.pattern.permute.xlu0 0
    %127 = vperm.xlu0 %126, %v88
    %v128 = vpop.permute.xlu0 %127
    %131 = vset.pattern.permute.xlu0 0
    %132 = vperm.xlu0 %131, %v89
    %v133 = vpop.permute.xlu0 %132
    %136 = vset.pattern.permute.xlu0 0
    %137 = vperm.xlu0 %136, %v90
    %v138 = vpop.permute.xlu0 %137
    %141 = vset.pattern.permute.xlu0 0
    %142 = vperm.xlu0 %141, %v91
    %v143 = vpop.permute.xlu0 %142
    %146 = vset.pattern.permute.xlu0 0
    %147 = vperm.xlu0 %146, %v92
    %v148 = vpop.permute.xlu0 %147
    %151 = vset.pattern.permute.xlu0 0
    %152 = vperm.xlu0 %151, %v93
    %v153 = vpop.permute.xlu0 %152
    %156 = vset.pattern.permute.xlu0 0
    %157 = vperm.xlu0 %156, %v94
    %v158 = vpop.permute.xlu0 %157
    %161 = vset.pattern.permute.xlu0 0
    %162 = vperm.xlu0 %161, %v95
    %v163 = vpop.permute.xlu0 %162
    %166 = vset.pattern.permute.xlu0 0
    %167 = vperm.xlu0 %166, %v96
    %v168 = vpop.permute.xlu0 %167
    %171 = vset.pattern.permute.xlu0 0
    %172 = vperm.xlu0 %171, %v97
    %v173 = vpop.permute.xlu0 %172
    %176 = vset.pattern.permute.xlu0 0
    %177 = vperm.xlu0 %176, %v98
    %v178 = vpop.permute.xlu0 %177
    %v181 = vlaneseq
    %v182 = vshrl.u32 %v181, 7
    %v183 = vsub.s32 0, %v182
    %v184 = vrot.slane %v99, %v183
    %v186 = vmul.f32 %v103, %v184
    %v187 = vmul.f32 %v108, %v184
    %v188 = vmul.f32 %v113, %v184
    %v189 = vmul.f32 %v118, %v184
    %v190 = vmul.f32 %v123, %v184
    %v191 = vmul.f32 %v128, %v184
    %v192 = vmul.f32 %v133, %v184
    %v193 = vmul.f32 %v138, %v184
    %v194 = vmul.f32 %v143, %v184
    %v195 = vmul.f32 %v148, %v184
    %v196 = vmul.f32 %v153, %v184
    %v197 = vmul.f32 %v158, %v184
    %v198 = vmul.f32 %v163, %v184
    %v199 = vmul.f32 %v168, %v184
    %v200 = vmul.f32 %v173, %v184
    %v201 = vmul.f32 %v178, %v184
    %v202 = vld [vmem:[#allocation7] sm:$0xff]
    %v203 = vld [vmem:[#allocation7 + $0x8] sm:$0xff]
    %v204 = vld [vmem:[#allocation7 + $0x10] sm:$0xff]
    %v205 = vld [vmem:[#allocation7 + $0x18] sm:$0xff]
    %v206 = vld [vmem:[#allocation7 + $0x20] sm:$0xff]
    %v207 = vld [vmem:[#allocation7 + $0x28] sm:$0xff]
    %v208 = vld [vmem:[#allocation7 + $0x30] sm:$0xff]
    %v209 = vld [vmem:[#allocation7 + $0x38] sm:$0xff]
    %v210 = vld [vmem:[#allocation7 + $0x40] sm:$0xff]
    %v211 = vld [vmem:[#allocation7 + $0x48] sm:$0xff]
    %v212 = vld [vmem:[#allocation7 + $0x50] sm:$0xff]
    %v213 = vld [vmem:[#allocation7 + $0x58] sm:$0xff]
    %v214 = vld [vmem:[#allocation7 + $0x60] sm:$0xff]
    %v215 = vld [vmem:[#allocation7 + $0x68] sm:$0xff]
    %v216 = vld [vmem:[#allocation7 + $0x70] sm:$0xff]
    %v217 = vld [vmem:[#allocation7 + $0x78] sm:$0xff]
    %219 = vset.pattern.permute.xlu0 0
    %220 = vperm.xlu0 %219, %v202
    %v221 = vpop.permute.xlu0 %220
    %224 = vset.pattern.permute.xlu0 0
    %225 = vperm.xlu0 %224, %v203
    %v226 = vpop.permute.xlu0 %225
    %229 = vset.pattern.permute.xlu0 0
    %230 = vperm.xlu0 %229, %v204
    %v231 = vpop.permute.xlu0 %230
    %234 = vset.pattern.permute.xlu0 0
    %235 = vperm.xlu0 %234, %v205
    %v236 = vpop.permute.xlu0 %235
    %239 = vset.pattern.permute.xlu0 0
    %240 = vperm.xlu0 %239, %v206
    %v241 = vpop.permute.xlu0 %240
    %244 = vset.pattern.permute.xlu0 0
    %245 = vperm.xlu0 %244, %v207
    %v246 = vpop.permute.xlu0 %245
    %249 = vset.pattern.permute.xlu0 0
    %250 = vperm.xlu0 %249, %v208
    %v251 = vpop.permute.xlu0 %250
    %254 = vset.pattern.permute.xlu0 0
    %255 = vperm.xlu0 %254, %v209
    %v256 = vpop.permute.xlu0 %255
    %259 = vset.pattern.permute.xlu0 0
    %260 = vperm.xlu0 %259, %v210
    %v261 = vpop.permute.xlu0 %260
    %264 = vset.pattern.permute.xlu0 0
    %265 = vperm.xlu0 %264, %v211
    %v266 = vpop.permute.xlu0 %265
    %269 = vset.pattern.permute.xlu0 0
    %270 = vperm.xlu0 %269, %v212
    %v271 = vpop.permute.xlu0 %270
    %274 = vset.pattern.permute.xlu0 0
    %275 = vperm.xlu0 %274, %v213
    %v276 = vpop.permute.xlu0 %275
    %279 = vset.pattern.permute.xlu0 0
    %280 = vperm.xlu0 %279, %v214
    %v281 = vpop.permute.xlu0 %280
    %284 = vset.pattern.permute.xlu0 0
    %285 = vperm.xlu0 %284, %v215
    %v286 = vpop.permute.xlu0 %285
    %289 = vset.pattern.permute.xlu0 0
    %290 = vperm.xlu0 %289, %v216
    %v291 = vpop.permute.xlu0 %290
    %294 = vset.pattern.permute.xlu0 0
    %295 = vperm.xlu0 %294, %v217
    %v296 = vpop.permute.xlu0 %295
    %v298 = vadd.f32 %v186, %v221
    %v299 = vadd.f32 %v187, %v226
    %v300 = vadd.f32 %v188, %v231
    %v301 = vadd.f32 %v189, %v236
    %v302 = vadd.f32 %v190, %v241
    %v303 = vadd.f32 %v191, %v246
    %v304 = vadd.f32 %v192, %v251
    %v305 = vadd.f32 %v193, %v256
    %v306 = vadd.f32 %v194, %v261
    %v307 = vadd.f32 %v195, %v266
    %v308 = vadd.f32 %v196, %v271
    %v309 = vadd.f32 %v197, %v276
    %v310 = vadd.f32 %v198, %v281
    %v311 = vadd.f32 %v199, %v286
    %v312 = vadd.f32 %v200, %v291
    %v313 = vadd.f32 %v201, %v296
    %v314 = vtanh.pop %v298
    %v315 = vtanh.pop %v299
    %v316 = vtanh.pop %v300
    %v317 = vtanh.pop %v301
    %v318 = vtanh.pop %v302
    %v319 = vtanh.pop %v303
    %v320 = vtanh.pop %v304
    %v321 = vtanh.pop %v305
    %v322 = vtanh.pop %v306
    %v323 = vtanh.pop %v307
    %v324 = vtanh.pop %v308
    %v325 = vtanh.pop %v309
    %v326 = vtanh.pop %v310
    %v327 = vtanh.pop %v311
    %v328 = vtanh.pop %v312
    %v329 = vtanh.pop %v313
    %v330 = vld [vmem:[#allocation8] sm:$0xf]
    %v331 = vld [vmem:[#allocation10] sm:$0xf]
    %333 = vset.pattern.permute.xlu0 0
    %334 = vperm.xlu0 %333, %v331
    %v335 = vpop.permute.xlu0 %334
    %337 = vmatprep.subr.mxu0 0.0
    %338 = vmatpush1.msra.mxu0 %v314
    %339 = vmatprep.subr.mxu0 0.0
    %340 = vmatpush1.msra.mxu0 %v315
    %341 = vmatprep.subr.mxu0 0.0
    %342 = vmatpush1.msra.mxu0 %v316
    %343 = vmatprep.subr.mxu0 0.0
    %344 = vmatpush1.msra.mxu0 %v317
    %345 = vmatprep.subr.mxu0 0.0
    %346 = vmatpush1.msra.mxu0 %v318
    %347 = vmatprep.subr.mxu0 0.0
    %348 = vmatpush1.msra.mxu0 %v319
    %349 = vmatprep.subr.mxu0 0.0
    %350 = vmatpush1.msra.mxu0 %v320
    %351 = vmatprep.subr.mxu0 0.0
    %352 = vmatpush1.msra.mxu0 %v321
    %353 = vmatprep.subr.mxu0 0.0
    %354 = vmatpush1.msra.mxu0 %v322
    %355 = vmatprep.subr.mxu0 0.0
    %356 = vmatpush1.msra.mxu0 %v323
    %357 = vmatprep.subr.mxu0 0.0
    %358 = vmatpush1.msra.mxu0 %v324
    %359 = vmatprep.subr.mxu0 0.0
    %360 = vmatpush1.msra.mxu0 %v325
    %361 = vmatprep.subr.mxu0 0.0
    %362 = vmatpush1.msra.mxu0 %v326
    %363 = vmatprep.subr.mxu0 0.0
    %364 = vmatpush1.msra.mxu0 %v327
    %365 = vmatprep.subr.mxu0 0.0
    %366 = vmatpush1.msra.mxu0 %v328
    %367 = vmatprep.subr.mxu0 0.0
    %368 = vmatpush1.msra.mxu0 %v329
    %369 = vmatprep.subr.mxu0 0.0
    %370 = vmatpush1.msra.mxu0 0.0
    %371 = vmatprep.subr.mxu0 0.0
    %372 = vmatpush1.msra.mxu0 0.0
    %373 = vmatprep.subr.mxu0 0.0
    %374 = vmatpush1.msra.mxu0 0.0
    %375 = vmatprep.subr.mxu0 0.0
    %376 = vmatpush1.msra.mxu0 0.0
    %377 = vmatprep.subr.mxu0 0.0
    %378 = vmatpush1.msra.mxu0 0.0
    %379 = vmatprep.subr.mxu0 0.0
    %380 = vmatpush1.msra.mxu0 0.0
    %381 = vmatprep.subr.mxu0 0.0
    %382 = vmatpush1.msra.mxu0 0.0
    %383 = vmatprep.subr.mxu0 0.0
    %384 = vmatpush1.msra.mxu0 0.0
    %385 = vmatprep.subr.mxu0 0.0
    %386 = vmatpush1.msra.mxu0 0.0
    %387 = vmatprep.subr.mxu0 0.0
    %388 = vmatpush1.msra.mxu0 0.0
    %389 = vmatprep.subr.mxu0 0.0
    %390 = vmatpush1.msra.mxu0 0.0
    %391 = vmatprep.subr.mxu0 0.0
    %392 = vmatpush1.msra.mxu0 0.0
    %393 = vmatprep.subr.mxu0 0.0
    %394 = vmatpush1.msra.mxu0 0.0
    %395 = vmatprep.subr.mxu0 0.0
    %396 = vmatpush1.msra.mxu0 0.0
    %397 = vmatprep.subr.mxu0 0.0
    %398 = vmatpush1.msra.mxu0 0.0
    %399 = vmatprep.subr.mxu0 0.0
    %400 = vmatpush1.msra.mxu0 0.0
    %401 = vmatprep.mubr.f32.mxu0 0.0
    %402 = vmatmul.mubr.f32.gmra.mrb[0].mxu0 %v330
    %v403 = vpop.f32.mrb[0].mxu0
    %v404 = vadd.f32 %v335, %v403
    %v405 = vpop.f32.mrb[0].mxu0
    %406 = vdwg.mxu0
    %v407 = vtanh.pop %v404
    %v408 = vadd.f32 %v407, 1.0
    %v409 = vmul.f32 %v408, 0.5
    %410 = vst [vmem:[#allocation11] sm:$0xf] %v409
    // Predicated region
    $region42: #{tpu_custom_call.1} parent=1 // pred_check
      _
    $region43: #{tpu_custom_call.1} parent=1 // pred_check_branch
      %412 = sbr.rel (0) target = $region45
    $region44: #{tpu_custom_call.1} parent=1 // pred_region
      %s414 = ssub.s32 64, 64
      %415 = vsyncadd [#allocation4], %s414
      %s417 = sshll.u32 [#allocation11], 4
      %s418 = int_to_ptr.vmem [resolvable:$true] %s417
      %420 = dma.vmem_to_hbm [thread:$0]  %s418, 64, %s5, [#allocation4]
    $region45: #{tpu_custom_call.1} parent=1 // pred_fallthru
      _
    // Predicated region
    $region46: #{tpu_custom_call.1} parent=1 // pred_check
      _
    $region47: #{tpu_custom_call.1} parent=1 // pred_check_branch
      %422 = sbr.rel (0) target = $region49
    $region48: #{tpu_custom_call.1} parent=1 // pred_region
      %423 = dma.done [#allocation4], 64
    $region49: #{tpu_custom_call.1} parent=1 // pred_fallthru
      _
    %424 = vsyncpa [#allocation3], 1
    %425 = vsyncpa [#allocation6], 1
    %426 = vsyncpa [#allocation9], 1
    %427 = vsyncpa [#allocation4], 1

// kernel: tpu_custom_call.1
$region0: #{tpu_custom_call.1}
  #allocation0 [shape = 'u32[]', space=smem, size = 0x4, offset = 0x4, fixed_abs, tag = 'smem constant byte address 0x4 - core index']
  #allocation1 [shape = 'u32[144,128]{1,0:T(1,128)}', space=vmem, size = 0x12000, scoped, tag = 'internal scratch']
  %s0 = inlined_call_operand.hbm [shape: f32[1,128], index: 0, kind: input, shape index: {}]
  %s1 = inlined_call_operand.hbm [shape: f32[128,1], index: 1, kind: input, shape index: {}]
  %s2 = inlined_call_operand.hbm [shape: f32[128,1], index: 2, kind: input, shape index: {}]
  %s3 = inlined_call_operand.hbm [shape: f32[4,128], index: 3, kind: input, shape index: {}]
  %s4 = inlined_call_operand.hbm [shape: f32[4,1], index: 4, kind: input, shape index: {}]
  %s5 = inlined_call_operand.hbm [shape: f32[4,128], index: 5, kind: output, shape index: {}]
  %s6 = sld [smem:[#allocation0]]
  $region50: #{tpu_custom_call.1} parent=0
    _
  %s8 = ssub.s32 1, %s6
  %s9 = scalar_select 0, %s8, %s6
  $region1: #{tpu_custom_call.1} parent=0
    #allocation2 [shape = 'u8[512]{0}', space=vmem, size = 0x400, scoped, tag = 'input window, operand 0, single buffered']
    #allocation3 [shape = 's32[1]{0}', space=sflag, size = 0x4, scoped, tag = 'scoped memory for tpu_custom_call.1']
    #allocation4 [shape = 's32[1]{0}', space=sflag, size = 0x4, scoped, tag = 'scoped memory for tpu_custom_call.1']
    #allocation5 [shape = 'u8[65536]{0}', space=vmem, size = 0x10000, scoped, tag = 'input window, operand 1, single buffered']
    #allocation6 [shape = 's32[1]{0}', space=sflag, size = 0x4, scoped, tag = 'scoped memory for tpu_custom_call.1']
    #allocation7 [shape = 'u8[65536]{0}', space=vmem, size = 0x10000, scoped, tag = 'input window, operand 2, single buffered']
    #allocation8 [shape = 'u8[2048]{0}', space=vmem, size = 0x800, scoped, tag = 'input window, operand 3, single buffered']
    #allocation9 [shape = 's32[1]{0}', space=sflag, size = 0x4, scoped, tag = 'scoped memory for tpu_custom_call.1']
    #allocation10 [shape = 'u8[2048]{0}', space=vmem, size = 0x800, scoped, tag = 'input window, operand 4, single buffered']
    #allocation11 [shape = 'u8[2048]{0}', space=vmem, size = 0x800, scoped, tag = 'output window, operand 0, single buffered']
    %10 = vsyncpa [#allocation3], 0
    %11 = vsyncpa [#allocation6], 0
    %12 = vsyncpa [#allocation9], 0
    %13 = vsyncpa [#allocation4], 0
    // Predicated region
    $region2: #{tpu_custom_call.1} parent=1 // pred_check
      _
    $region3: #{tpu_custom_call.1} parent=1 // pred_check_branch
      %15 = sbr.rel (0) target = $region5
    $region4: #{tpu_custom_call.1} parent=1 // pred_region
      %s17 = ssub.s32 16, 16
      %18 = vsyncadd [#allocation3], %s17
      %s20 = sshll.u32 [#allocation2], 4
      %s21 = int_to_ptr.vmem [resolvable:$true] %s20
      %23 = dma.hbm_to_vmem [thread:$0]  %s0, 16, %s21, [#allocation3]
    $region5: #{tpu_custom_call.1} parent=1 // pred_fallthru
      _
    // Predicated region
    $region6: #{tpu_custom_call.1} parent=1 // pred_check
      _
    $region7: #{tpu_custom_call.1} parent=1 // pred_check_branch
      %25 = sbr.rel (0) target = $region9
    $region8: #{tpu_custom_call.1} parent=1 // pred_region
      %s27 = ssub.s32 2048, 2048
      %28 = vsyncadd [#allocation6], %s27
      %s29 = sshll.u32 [#allocation5], 4
      %s30 = int_to_ptr.vmem [resolvable:$true] %s29
      %35 = dma.hbm_to_vmem [thread:$0]  %s1, 2048, %s30, [#allocation6], 128, 128, 8
    $region9: #{tpu_custom_call.1} parent=1 // pred_fallthru
      _
    // Predicated region
    $region10: #{tpu_custom_call.1} parent=1 // pred_check
      _
    $region11: #{tpu_custom_call.1} parent=1 // pred_check_branch
      %37 = sbr.rel (0) target = $region13
    $region12: #{tpu_custom_call.1} parent=1 // pred_region
      %s39 = ssub.s32 2048, 2048
      %40 = vsyncadd [#allocation6], %s39
      %s41 = sshll.u32 [#allocation7], 4
      %s42 = int_to_ptr.vmem [resolvable:$true] %s41
      %47 = dma.hbm_to_vmem [thread:$0]  %s2, 2048, %s42, [#allocation6], 128, 128, 8
    $region13: #{tpu_custom_call.1} parent=1 // pred_fallthru
      _
    // Predicated region
    $region14: #{tpu_custom_call.1} parent=1 // pred_check
      _
    $region15: #{tpu_custom_call.1} parent=1 // pred_check_branch
      %49 = sbr.rel (0) target = $region17
    $region16: #{tpu_custom_call.1} parent=1 // pred_region
      %s51 = ssub.s32 64, 64
      %52 = vsyncadd [#allocation9], %s51
      %s54 = sshll.u32 [#allocation8], 4
      %s55 = int_to_ptr.vmem [resolvable:$true] %s54
      %57 = dma.hbm_to_vmem [thread:$0]  %s3, 64, %s55, [#allocation9]
    $region17: #{tpu_custom_call.1} parent=1 // pred_fallthru
      _
    // Predicated region
    $region18: #{tpu_custom_call.1} parent=1 // pred_check
      _
    $region19: #{tpu_custom_call.1} parent=1 // pred_check_branch
      %59 = sbr.rel (0) target = $region21
    $region20: #{tpu_custom_call.1} parent=1 // pred_region
      %s61 = ssub.s32 64, 64
      %62 = vsyncadd [#allocation9], %s61
      %s64 = sshll.u32 [#allocation10], 4
      %s65 = int_to_ptr.vmem [resolvable:$true] %s64
      %67 = dma.hbm_to_vmem [thread:$0]  %s4, 64, %s65, [#allocation9]
    $region21: #{tpu_custom_call.1} parent=1 // pred_fallthru
      _
    // Predicated region
    $region22: #{tpu_custom_call.1} parent=1 // pred_check
      _
    $region23: #{tpu_custom_call.1} parent=1 // pred_check_branch
      %69 = sbr.rel (0) target = $region25
    $region24: #{tpu_custom_call.1} parent=1 // pred_region
      %70 = dma.done [#allocation3], 16
    $region25: #{tpu_custom_call.1} parent=1 // pred_fallthru
      _
    // Predicated region
    $region26: #{tpu_custom_call.1} parent=1 // pred_check
      _
    $region27: #{tpu_custom_call.1} parent=1 // pred_check_branch
      %72 = sbr.rel (0) target = $region29
    $region28: #{tpu_custom_call.1} parent=1 // pred_region
      %73 = dma.done [#allocation6], 2048
    $region29: #{tpu_custom_call.1} parent=1 // pred_fallthru
      _
    // Predicated region
    $region30: #{tpu_custom_call.1} parent=1 // pred_check
      _
    $region31: #{tpu_custom_call.1} parent=1 // pred_check_branch
      %75 = sbr.rel (0) target = $region33
    $region32: #{tpu_custom_call.1} parent=1 // pred_region
      %76 = dma.done [#allocation6], 2048
    $region33: #{tpu_custom_call.1} parent=1 // pred_fallthru
      _
    // Predicated region
    $region34: #{tpu_custom_call.1} parent=1 // pred_check
      _
    $region35: #{tpu_custom_call.1} parent=1 // pred_check_branch
      %78 = sbr.rel (0) target = $region37
    $region36: #{tpu_custom_call.1} parent=1 // pred_region
      %79 = dma.done [#allocation9], 64
    $region37: #{tpu_custom_call.1} parent=1 // pred_fallthru
      _
    // Predicated region
    $region38: #{tpu_custom_call.1} parent=1 // pred_check
      _
    $region39: #{tpu_custom_call.1} parent=1 // pred_check_branch
      %81 = sbr.rel (0) target = $region41
    $region40: #{tpu_custom_call.1} parent=1 // pred_region
      %82 = dma.done [#allocation9], 64
    $region41: #{tpu_custom_call.1} parent=1 // pred_fallthru
      _
    %v83 = vld [vmem:[#allocation5] sm:$0xff]
    %v84 = vld [vmem:[#allocation5 + $0x8] sm:$0xff]
    %v85 = vld [vmem:[#allocation5 + $0x10] sm:$0xff]
    %v86 = vld [vmem:[#allocation5 + $0x18] sm:$0xff]
    %v87 = vld [vmem:[#allocation5 + $0x20] sm:$0xff]
    %v88 = vld [vmem:[#allocation5 + $0x28] sm:$0xff]
    %v89 = vld [vmem:[#allocation5 + $0x30] sm:$0xff]
    %v90 = vld [vmem:[#allocation5 + $0x38] sm:$0xff]
    %v91 = vld [vmem:[#allocation5 + $0x40] sm:$0xff]
    %v92 = vld [vmem:[#allocation5 + $0x48] sm:$0xff]
    %v93 = vld [vmem:[#allocation5 + $0x50] sm:$0xff]
    %v94 = vld [vmem:[#allocation5 + $0x58] sm:$0xff]
    %v95 = vld [vmem:[#allocation5 + $0x60] sm:$0xff]
    %v96 = vld [vmem:[#allocation5 + $0x68] sm:$0xff]
    %v97 = vld [vmem:[#allocation5 + $0x70] sm:$0xff]
    %v98 = vld [vmem:[#allocation5 + $0x78] sm:$0xff]
    %v99 = vld [vmem:[#allocation2] sm:$0x1]
    %101 = vset.pattern.permute.xlu0 0
    %102 = vperm.xlu0 %101, %v83
    %v103 = vpop.permute.xlu0 %102
    %106 = vset.pattern.permute.xlu0 0
    %107 = vperm.xlu0 %106, %v84
    %v108 = vpop.permute.xlu0 %107
    %111 = vset.pattern.permute.xlu0 0
    %112 = vperm.xlu0 %111, %v85
    %v113 = vpop.permute.xlu0 %112
    %116 = vset.pattern.permute.xlu0 0
    %117 = vperm.xlu0 %116, %v86
    %v118 = vpop.permute.xlu0 %117
    %121 = vset.pattern.permute.xlu0 0
    %122 = vperm.xlu0 %121, %v87
    %v123 = vpop.permute.xlu0 %122
    %126 = vset.pattern.permute.xlu0 0
    %127 = vperm.xlu0 %126, %v88
    %v128 = vpop.permute.xlu0 %127
    %131 = vset.pattern.permute.xlu0 0
    %132 = vperm.xlu0 %131, %v89
    %v133 = vpop.permute.xlu0 %132
    %136 = vset.pattern.permute.xlu0 0
    %137 = vperm.xlu0 %136, %v90
    %v138 = vpop.permute.xlu0 %137
    %141 = vset.pattern.permute.xlu0 0
    %142 = vperm.xlu0 %141, %v91
    %v143 = vpop.permute.xlu0 %142
    %146 = vset.pattern.permute.xlu0 0
    %147 = vperm.xlu0 %146, %v92
    %v148 = vpop.permute.xlu0 %147
    %151 = vset.pattern.permute.xlu0 0
    %152 = vperm.xlu0 %151, %v93
    %v153 = vpop.permute.xlu0 %152
    %156 = vset.pattern.permute.xlu0 0
    %157 = vperm.xlu0 %156, %v94
    %v158 = vpop.permute.xlu0 %157
    %161 = vset.pattern.permute.xlu0 0
    %162 = vperm.xlu0 %161, %v95
    %v163 = vpop.permute.xlu0 %162
    %166 = vset.pattern.permute.xlu0 0
    %167 = vperm.xlu0 %166, %v96
    %v168 = vpop.permute.xlu0 %167
    %171 = vset.pattern.permute.xlu0 0
    %172 = vperm.xlu0 %171, %v97
    %v173 = vpop.permute.xlu0 %172
    %176 = vset.pattern.permute.xlu0 0
    %177 = vperm.xlu0 %176, %v98
    %v178 = vpop.permute.xlu0 %177
    %v181 = vlaneseq
    %v182 = vshrl.u32 %v181, 7
    %v183 = vsub.s32 0, %v182
    %v184 = vrot.slane %v99, %v183
    %v186 = vmul.f32 %v103, %v184
    %v187 = vmul.f32 %v108, %v184
    %v188 = vmul.f32 %v113, %v184
    %v189 = vmul.f32 %v118, %v184
    %v190 = vmul.f32 %v123, %v184
    %v191 = vmul.f32 %v128, %v184
    %v192 = vmul.f32 %v133, %v184
    %v193 = vmul.f32 %v138, %v184
    %v194 = vmul.f32 %v143, %v184
    %v195 = vmul.f32 %v148, %v184
    %v196 = vmul.f32 %v153, %v184
    %v197 = vmul.f32 %v158, %v184
    %v198 = vmul.f32 %v163, %v184
    %v199 = vmul.f32 %v168, %v184
    %v200 = vmul.f32 %v173, %v184
    %v201 = vmul.f32 %v178, %v184
    %v202 = vld [vmem:[#allocation7] sm:$0xff]
    %v203 = vld [vmem:[#allocation7 + $0x8] sm:$0xff]
    %v204 = vld [vmem:[#allocation7 + $0x10] sm:$0xff]
    %v205 = vld [vmem:[#allocation7 + $0x18] sm:$0xff]
    %v206 = vld [vmem:[#allocation7 + $0x20] sm:$0xff]
    %v207 = vld [vmem:[#allocation7 + $0x28] sm:$0xff]
    %v208 = vld [vmem:[#allocation7 + $0x30] sm:$0xff]
    %v209 = vld [vmem:[#allocation7 + $0x38] sm:$0xff]
    %v210 = vld [vmem:[#allocation7 + $0x40] sm:$0xff]
    %v211 = vld [vmem:[#allocation7 + $0x48] sm:$0xff]
    %v212 = vld [vmem:[#allocation7 + $0x50] sm:$0xff]
    %v213 = vld [vmem:[#allocation7 + $0x58] sm:$0xff]
    %v214 = vld [vmem:[#allocation7 + $0x60] sm:$0xff]
    %v215 = vld [vmem:[#allocation7 + $0x68] sm:$0xff]
    %v216 = vld [vmem:[#allocation7 + $0x70] sm:$0xff]
    %v217 = vld [vmem:[#allocation7 + $0x78] sm:$0xff]
    %219 = vset.pattern.permute.xlu0 0
    %220 = vperm.xlu0 %219, %v202
    %v221 = vpop.permute.xlu0 %220
    %224 = vset.pattern.permute.xlu0 0
    %225 = vperm.xlu0 %224, %v203
    %v226 = vpop.permute.xlu0 %225
    %229 = vset.pattern.permute.xlu0 0
    %230 = vperm.xlu0 %229, %v204
    %v231 = vpop.permute.xlu0 %230
    %234 = vset.pattern.permute.xlu0 0
    %235 = vperm.xlu0 %234, %v205
    %v236 = vpop.permute.xlu0 %235
    %239 = vset.pattern.permute.xlu0 0
    %240 = vperm.xlu0 %239, %v206
    %v241 = vpop.permute.xlu0 %240
    %244 = vset.pattern.permute.xlu0 0
    %245 = vperm.xlu0 %244, %v207
    %v246 = vpop.permute.xlu0 %245
    %249 = vset.pattern.permute.xlu0 0
    %250 = vperm.xlu0 %249, %v208
    %v251 = vpop.permute.xlu0 %250
    %254 = vset.pattern.permute.xlu0 0
    %255 = vperm.xlu0 %254, %v209
    %v256 = vpop.permute.xlu0 %255
    %259 = vset.pattern.permute.xlu0 0
    %260 = vperm.xlu0 %259, %v210
    %v261 = vpop.permute.xlu0 %260
    %264 = vset.pattern.permute.xlu0 0
    %265 = vperm.xlu0 %264, %v211
    %v266 = vpop.permute.xlu0 %265
    %269 = vset.pattern.permute.xlu0 0
    %270 = vperm.xlu0 %269, %v212
    %v271 = vpop.permute.xlu0 %270
    %274 = vset.pattern.permute.xlu0 0
    %275 = vperm.xlu0 %274, %v213
    %v276 = vpop.permute.xlu0 %275
    %279 = vset.pattern.permute.xlu0 0
    %280 = vperm.xlu0 %279, %v214
    %v281 = vpop.permute.xlu0 %280
    %284 = vset.pattern.permute.xlu0 0
    %285 = vperm.xlu0 %284, %v215
    %v286 = vpop.permute.xlu0 %285
    %289 = vset.pattern.permute.xlu0 0
    %290 = vperm.xlu0 %289, %v216
    %v291 = vpop.permute.xlu0 %290
    %294 = vset.pattern.permute.xlu0 0
    %295 = vperm.xlu0 %294, %v217
    %v296 = vpop.permute.xlu0 %295
    %v298 = vadd.f32 %v186, %v221
    %v299 = vadd.f32 %v187, %v226
    %v300 = vadd.f32 %v188, %v231
    %v301 = vadd.f32 %v189, %v236
    %v302 = vadd.f32 %v190, %v241
    %v303 = vadd.f32 %v191, %v246
    %v304 = vadd.f32 %v192, %v251
    %v305 = vadd.f32 %v193, %v256
    %v306 = vadd.f32 %v194, %v261
    %v307 = vadd.f32 %v195, %v266
    %v308 = vadd.f32 %v196, %v271
    %v309 = vadd.f32 %v197, %v276
    %v310 = vadd.f32 %v198, %v281
    %v311 = vadd.f32 %v199, %v286
    %v312 = vadd.f32 %v200, %v291
    %v313 = vadd.f32 %v201, %v296
    %v314 = vtanh.pop %v298
    %v315 = vtanh.pop %v299
    %v316 = vtanh.pop %v300
    %v317 = vtanh.pop %v301
    %v318 = vtanh.pop %v302
    %v319 = vtanh.pop %v303
    %v320 = vtanh.pop %v304
    %v321 = vtanh.pop %v305
    %v322 = vtanh.pop %v306
    %v323 = vtanh.pop %v307
    %v324 = vtanh.pop %v308
    %v325 = vtanh.pop %v309
    %v326 = vtanh.pop %v310
    %v327 = vtanh.pop %v311
    %v328 = vtanh.pop %v312
    %v329 = vtanh.pop %v313
    %v330 = vld [vmem:[#allocation8] sm:$0xf]
    %v331 = vld [vmem:[#allocation10] sm:$0xf]
    %333 = vset.pattern.permute.xlu0 0
    %334 = vperm.xlu0 %333, %v331
    %v335 = vpop.permute.xlu0 %334
    %337 = vmatprep.subr.mxu0 0.0
    %338 = vmatpush1.msra.mxu0 %v314
    %339 = vmatprep.subr.mxu0 0.0
    %340 = vmatpush1.msra.mxu0 %v315
    %341 = vmatprep.subr.mxu0 0.0
    %342 = vmatpush1.msra.mxu0 %v316
    %343 = vmatprep.subr.mxu0 0.0
    %344 = vmatpush1.msra.mxu0 %v317
    %345 = vmatprep.subr.mxu0 0.0
    %346 = vmatpush1.msra.mxu0 %v318
    %347 = vmatprep.subr.mxu0 0.0
    %348 = vmatpush1.msra.mxu0 %v319
    %349 = vmatprep.subr.mxu0 0.0
    %350 = vmatpush1.msra.mxu0 %v320
    %351 = vmatprep.subr.mxu0 0.0
    %352 = vmatpush1.msra.mxu0 %v321
    %353 = vmatprep.subr.mxu0 0.0
    %354 = vmatpush1.msra.mxu0 %v322
    %355 = vmatprep.subr.mxu0 0.0
    %356 = vmatpush1.msra.mxu0 %v323
    %357 = vmatprep.subr.mxu0 0.0
    %358 = vmatpush1.msra.mxu0 %v324
    %359 = vmatprep.subr.mxu0 0.0
    %360 = vmatpush1.msra.mxu0 %v325
    %361 = vmatprep.subr.mxu0 0.0
    %362 = vmatpush1.msra.mxu0 %v326
    %363 = vmatprep.subr.mxu0 0.0
    %364 = vmatpush1.msra.mxu0 %v327
    %365 = vmatprep.subr.mxu0 0.0
    %366 = vmatpush1.msra.mxu0 %v328
    %367 = vmatprep.subr.mxu0 0.0
    %368 = vmatpush1.msra.mxu0 %v329
    %369 = vmatprep.subr.mxu0 0.0
    %370 = vmatpush1.msra.mxu0 0.0
    %371 = vmatprep.subr.mxu0 0.0
    %372 = vmatpush1.msra.mxu0 0.0
    %373 = vmatprep.subr.mxu0 0.0
    %374 = vmatpush1.msra.mxu0 0.0
    %375 = vmatprep.subr.mxu0 0.0
    %376 = vmatpush1.msra.mxu0 0.0
    %377 = vmatprep.subr.mxu0 0.0
    %378 = vmatpush1.msra.mxu0 0.0
    %379 = vmatprep.subr.mxu0 0.0
    %380 = vmatpush1.msra.mxu0 0.0
    %381 = vmatprep.subr.mxu0 0.0
    %382 = vmatpush1.msra.mxu0 0.0
    %383 = vmatprep.subr.mxu0 0.0
    %384 = vmatpush1.msra.mxu0 0.0
    %385 = vmatprep.subr.mxu0 0.0
    %386 = vmatpush1.msra.mxu0 0.0
    %387 = vmatprep.subr.mxu0 0.0
    %388 = vmatpush1.msra.mxu0 0.0
    %389 = vmatprep.subr.mxu0 0.0
    %390 = vmatpush1.msra.mxu0 0.0
    %391 = vmatprep.subr.mxu0 0.0
    %392 = vmatpush1.msra.mxu0 0.0
    %393 = vmatprep.subr.mxu0 0.0
    %394 = vmatpush1.msra.mxu0 0.0
    %395 = vmatprep.subr.mxu0 0.0
    %396 = vmatpush1.msra.mxu0 0.0
    %397 = vmatprep.subr.mxu0 0.0
    %398 = vmatpush1.msra.mxu0 0.0
    %399 = vmatprep.subr.mxu0 0.0
    %400 = vmatpush1.msra.mxu0 0.0
    %401 = vmatprep.mubr.f32.mxu0 0.0
    %402 = vmatmul.mubr.f32.gmra.mrb[0].mxu0 %v330
    %v403 = vpop.f32.mrb[0].mxu0
    %v404 = vadd.f32 %v335, %v403
    %v405 = vpop.f32.mrb[0].mxu0
    %406 = vdwg.mxu0
    %v407 = vtanh.pop %v404
    %v408 = vadd.f32 %v407, 1.0
    %v409 = vmul.f32 %v408, 0.5
    %410 = vst [vmem:[#allocation11] sm:$0xf] %v409
    // Predicated region
    $region42: #{tpu_custom_call.1} parent=1 // pred_check
      _
    $region43: #{tpu_custom_call.1} parent=1 // pred_check_branch
      %412 = sbr.rel (0) target = $region45
    $region44: #{tpu_custom_call.1} parent=1 // pred_region
      %s414 = ssub.s32 64, 64
      %415 = vsyncadd [#allocation4], %s414
      %s417 = sshll.u32 [#allocation11], 4
      %s418 = int_to_ptr.vmem [resolvable:$true] %s417
      %420 = dma.vmem_to_hbm [thread:$0]  %s418, 64, %s5, [#allocation4]
    $region45: #{tpu_custom_call.1} parent=1 // pred_fallthru
      _
    // Predicated region
    $region46: #{tpu_custom_call.1} parent=1 // pred_check
      _
    $region47: #{tpu_custom_call.1} parent=1 // pred_check_branch
      %422 = sbr.rel (0) target = $region49
    $region48: #{tpu_custom_call.1} parent=1 // pred_region
      %423 = dma.done [#allocation4], 64
    $region49: #{tpu_custom_call.1} parent=1 // pred_fallthru
      _
    %424 = vsyncpa [#allocation3], 1
    %425 = vsyncpa [#allocation6], 1
    %426 = vsyncpa [#allocation9], 1
    %427 = vsyncpa [#allocation4], 1

</llo_original>
